<compile_context>
chip_gen: v6e
topology: v6e:2x2x1
jax: 0.10.0
libtpu: 0.0.40
codegen_flags: <defaults>
</compile_context>

<pallas_src>
import functools

import jax
import jax.numpy as jnp
from jax.experimental import pallas as pl
from jax.experimental.pallas import tpu as pltpu

LN_EPS = 1e-6  # Dinov2Config.layer_norm_eps default


def _layernorm(x, w, b):
    mu = jnp.mean(x, axis=-1, keepdims=True)
    var = jnp.mean((x - mu) ** 2, axis=-1, keepdims=True)
    return (x - mu) * jax.lax.rsqrt(var + LN_EPS) * w + b


def _vmem_limit_bytes():
    # v7x has only 64 MiB physical VMEM per TensorCore (v5e/v6e: 128 MiB); the
    # default scoped limit is much smaller.  Leave ~8 MiB headroom for Mosaic's
    # internal scratch.
    try:
        cap = int(pltpu.get_tpu_info().vmem_capacity_bytes)
        return int(min(100 * 1024 * 1024, cap - 8 * 1024 * 1024))
    except Exception:
        return 48 * 1024 * 1024


# ---------------------------------------------------------------------------
# Kernel 1: patch embedding (= strided conv as matmul) + CLS prepend + pos add
# ---------------------------------------------------------------------------
def embed_kernel(x_ref, w_ref, b_ref, cls_ref, pos_ref, o_ref):
    # x_ref: (P, C*p*p) bf16 unfolded patches for one batch element
    # w_ref: (C*p*p, H) bf16   b_ref/cls_ref: (1, H) f32   pos_ref: (T, H) f32
    patches = jnp.dot(x_ref[...], w_ref[...],
                      preferred_element_type=jnp.float32) + b_ref[...]
    P = patches.shape[0]
    # No concatenate: write CLS row and patch rows directly (saves a (T,H) copy).
    o_ref[pl.ds(0, 1), :] = cls_ref[...] + pos_ref[pl.ds(0, 1), :]
    o_ref[pl.ds(1, P), :] = patches + pos_ref[pl.ds(1, P), :]


# ---------------------------------------------------------------------------
# Kernel 2: fused Dinov2 encoder.  grid = (layer, batch); the per-batch hidden
# state lives in a (B, T, H) VMEM scratch across the (outer, arbitrary) layer
# axis, so each layer's weights (stacked along a leading layer axis) are DMA'd
# once per layer and reused for every batch row.
#   LN1 -> MHSA -> layer_scale1 -> +res -> LN2 -> MLP(gelu) -> layer_scale2 -> +res
# ---------------------------------------------------------------------------
def encoder_kernel(emb_ref,
                   ln1w_ref, ln1b_ref, wqkv_ref, bqkv_ref, wo_ref, bo_ref,
                   ls1_ref,
                   ln2w_ref, ln2b_ref, w1_ref, b1_ref, w2_ref, b2_ref, ls2_ref,
                   hs_ref, h_scratch, *, num_heads, head_dim):
    layer = pl.program_id(0)
    batch = pl.program_id(1)

    @pl.when(layer == 0)
    def _():
        h_scratch[batch] = emb_ref[...]        # load embeddings for this batch row

    x = h_scratch[batch]                       # (T, H) f32 carry
    T, H = x.shape
    nh, hd = num_heads, head_dim

    # ---- attention ---------------------------------------------------------
    h1 = _layernorm(x, ln1w_ref[...], ln1b_ref[...])                      # f32
    # Fused, lane-dense QKV projection (bf16 MXU operands, f32 accumulation).
    # The 1/sqrt(head_dim) softmax scale is folded into the Q columns of
    # wqkv/bqkv at init, so no score scaling is needed below.
    qkv = jnp.dot(h1.astype(jnp.bfloat16), wqkv_ref[...],
                  preferred_element_type=jnp.float32) + bqkv_ref[...]     # (T, 3H)
    qkv = qkv.astype(jnp.bfloat16)

    def split_heads(col_off):
        # (T, 3H) -> (nh, T, hd): static lane slices stacked on a leading axis
        # (pure copies, no matmul work, no (nh, T, H) broadcast).
        return jnp.stack(
            [qkv[:, col_off + n * hd: col_off + (n + 1) * hd] for n in range(nh)],
            axis=0)

    q = split_heads(0)            # (nh, T, hd) bf16 (already scaled)
    k = split_heads(H)
    v = split_heads(2 * H)

    s = jnp.einsum('nqd,nkd->nqk', q, k,
                   preferred_element_type=jnp.float32)                    # (nh,T,T)
    s = s - jnp.max(s, axis=-1, keepdims=True)
    p = jnp.exp(s)                                                        # f32 softmax
    p = p * pl.reciprocal(jnp.sum(p, axis=-1, keepdims=True), approx=True)

    ctx = jnp.einsum('nqk,nkd->nqd', p.astype(jnp.bfloat16), v,
                     preferred_element_type=jnp.float32)                  # (nh,T,hd)
    # merge heads back to lane-dense (T, nh*hd) and do one K=H output GEMM
    ctx = jnp.concatenate([ctx[n].astype(jnp.bfloat16) for n in range(nh)],
                          axis=-1)                                        # (T, H)
    attn = jnp.dot(ctx, wo_ref[...],
                   preferred_element_type=jnp.float32) + bo_ref[...]      # (T, H)

    x = x + ls1_ref[...] * attn                 # layer_scale1 + residual (f32)

    # ---- MLP ----------------------------------------------------------------
    # TODO(synk): at ViT-large sizes on v7x (64 MiB VMEM) chunk w1/w2 over the
    # 4H dimension (extra inner grid axis or pltpu.emit_pipeline).
    # TODO(synk): for very large image sizes (T ~ 1370) switch the attention to
    # a key-tiled online softmax instead of materializing (nh, T, T).
    h2 = _layernorm(x, ln2w_ref[...], ln2b_ref[...])
    m = jnp.dot(h2.astype(jnp.bfloat16), w1_ref[...],
                preferred_element_type=jnp.float32) + b1_ref[...]
    # tanh GELU (EUP slot); HF Dinov2 default is exact erf GELU (~1e-3 delta).
    m = jax.nn.gelu(m, approximate=True)
    m = jnp.dot(m.astype(jnp.bfloat16), w2_ref[...],
                preferred_element_type=jnp.float32) + b2_ref[...]

    x = x + ls2_ref[...] * m                    # layer_scale2 + residual

    h_scratch[batch] = x                        # carry to next layer
    hs_ref[...] = x.astype(hs_ref.dtype)        # bf16 per-layer hidden state


# ---------------------------------------------------------------------------
# Wrappers
# ---------------------------------------------------------------------------
def _full_spec_1d_grid(a):
    # whole-array block, same block for every grid step (grid rank 1)
    return pl.BlockSpec(a.shape, lambda b, n=a.ndim: (0,) * n)


def patch_embeddings(pixel_values, params):
    B, C, Himg, Wimg = pixel_values.shape
    p = params['patch_size']
    Hs = params['hidden_size']
    Hp, Wp = Himg // p, Wimg // p
    P = Hp * Wp
    K = C * p * p
    T = P + 1

    # TODO(synk): fold this NCHW patch unfold into the embed kernel's BlockSpec
    # (patch-row grid) to avoid materializing (B, P, K) in HBM for large images.
    x = pixel_values.reshape(B, C, Hp, p, Wp, p)
    x = x.transpose(0, 2, 4, 1, 3, 5).reshape(B, P, K).astype(jnp.bfloat16)

    args = (params['patch_w'], params['patch_b'], params['cls'], params['pos'])
    in_specs = [pl.BlockSpec((None, P, K), lambda b: (b, 0, 0))] + \
               [_full_spec_1d_grid(a) for a in args]
    out_specs = pl.BlockSpec((None, T, Hs), lambda b: (b, 0, 0))

    return pl.pallas_call(
        embed_kernel,
        grid=(B,),
        out_shape=jax.ShapeDtypeStruct((B, T, Hs), jnp.float32),
        in_specs=in_specs,
        out_specs=out_specs,
        compiler_params=pltpu.CompilerParams(dimension_semantics=("parallel",)),
    )(x, *args)


def run_encoder(emb, enc, num_heads):
    """Fused encoder: one pallas_call over grid (layer, batch)."""
    B, T, H = emb.shape
    names = ('ln1_w', 'ln1_b', 'wqkv', 'bqkv', 'wo', 'bo', 'ls1',
             'ln2_w', 'ln2_b', 'w1', 'b1', 'w2', 'b2', 'ls2')
    args = tuple(enc[n] for n in names)
    L = enc['wqkv'].shape[0]
    hd = H // num_heads

    def layer_spec(stacked):
        # stacked: (L, *ws) -> block (None, *ws); same block index for every
        # inner batch step, so each layer's weights are DMA'd once per layer.
        ws = stacked.shape[1:]
        return pl.BlockSpec((None,) + ws,
                            lambda l, b, r=len(ws): (l,) + (0,) * r)

    # embeddings are only consumed at layer 0; collapse the index afterwards so
    # the pipeline skips re-streaming them for layer > 0.
    emb_spec = pl.BlockSpec((None, T, H),
                            lambda l, b: (jnp.where(l == 0, b, 0), 0, 0))

    in_specs = [emb_spec] + [layer_spec(a) for a in args]
    out_specs = pl.BlockSpec((None, None, T, H), lambda l, b: (b, l, 0, 0))

    kern = functools.partial(encoder_kernel, num_heads=num_heads, head_dim=hd)
    return pl.pallas_call(
        kern,
        grid=(L, B),
        out_shape=jax.ShapeDtypeStruct((B, L, T, H), jnp.bfloat16),
        in_specs=in_specs,
        out_specs=out_specs,
        scratch_shapes=[pltpu.VMEM((B, T, H), jnp.float32)],
        compiler_params=pltpu.CompilerParams(
            # layer axis carries the hidden state; batch is kept sequential too
            # (safe everywhere).  For v7x megacore, block the batch instead.
            dimension_semantics=("arbitrary", "arbitrary"),
            vmem_limit_bytes=_vmem_limit_bytes()),
    )(emb, *args)


def vit_plus_plus_forward(pixel_values, params):
    """Equivalent of ViTPlusPlus.forward (return_dict=True path)."""
    emb = patch_embeddings(pixel_values, params)     # dropout is identity (eval)
    per_layer = run_encoder(emb, params['enc'], params['num_heads'])  # (B,L,T,H) bf16
    L = per_layer.shape[1]
    hidden_states = (emb,) + tuple(per_layer[:, i] for i in range(L))
    # NOTE: no final vit.layernorm (forward calls vit.encoder directly).
    last_hidden_state = per_layer[:, L - 1].astype(jnp.float32)
    pooled_output = last_hidden_state[:, 0, :]
    return dict(last_hidden_state=last_hidden_state,
                pooler_output=pooled_output,
                hidden_states=hidden_states)


# ---------------------------------------------------------------------------
# Deterministic parameter construction (synthetic, not a checkpoint load).
# GEMM weights are stored bf16:
#   wqkv: (L, H, 3H)  columns [0:H]=Q (head-major, pre-scaled by 1/sqrt(hd)),
#                     [H:2H]=K, [2H:3H]=V
#   wo:   (L, H, H)   rows head-major   w1: (L, H, 4H)   w2: (L, 4H, H)
# ---------------------------------------------------------------------------
def init_params(key, image_size, num_channels, patch_size, hidden_size,
                num_layers, num_heads):
    num_patches = (image_size // patch_size) ** 2
    T = num_patches + 1
    k_dim = num_channels * patch_size * patch_size
    mlp_dim = 4 * hidden_size                        # Dinov2 mlp_ratio=4
    hd = hidden_size // num_heads
    L = num_layers

    def normal(k, shape, scale=0.02):
        return scale * jax.random.normal(k, shape, dtype=jnp.float32)

    keys = jax.random.split(key, 9)

    params = dict(
        patch_size=patch_size,
        hidden_size=hidden_size,
        num_heads=num_heads,
        # conv weight (hidden, C, p, p) stored pre-flattened/transposed: (C*p*p, H)
        patch_w=normal(keys[0], (k_dim, hidden_size)).astype(jnp.bfloat16),
        patch_b=jnp.zeros((1, hidden_size), jnp.float32),
        cls=normal(keys[1], (1, hidden_size)),
        pos=normal(keys[2], (T, hidden_size)),
    )

    # fused QKV weights; the softmax 1/sqrt(head_dim) scale is folded into the
    # Q columns (and Q bias, zero here) before the bf16 cast.
    q_scale = 1.0 / float(hd) ** 0.5
    wq = normal(keys[3], (L, hidden_size, hidden_size)) * q_scale
    wk = normal(keys[4], (L, hidden_size, hidden_size))
    wv = normal(keys[5], (L, hidden_size, hidden_size))
    wqkv = jnp.concatenate([wq, wk, wv], axis=-1).astype(jnp.bfloat16)
    bqkv = jnp.zeros((L, 1, 3 * hidden_size), jnp.float32)

    params['enc'] = dict(
        ln1_w=jnp.ones((L, 1, hidden_size), jnp.float32),
        ln1_b=jnp.zeros((L, 1, hidden_size), jnp.float32),
        wqkv=wqkv,
        bqkv=bqkv,
        wo=normal(keys[6], (L, hidden_size, hidden_size)).astype(jnp.bfloat16),
        bo=jnp.zeros((L, 1, hidden_size), jnp.float32),
        ls1=jnp.ones((L, 1, hidden_size), jnp.float32),   # layerscale_value=1.0
        ln2_w=jnp.ones((L, 1, hidden_size), jnp.float32),
        ln2_b=jnp.zeros((L, 1, hidden_size), jnp.float32),
        w1=normal(keys[7], (L, hidden_size, mlp_dim)).astype(jnp.bfloat16),
        b1=jnp.zeros((L, 1, mlp_dim), jnp.float32),
        w2=normal(keys[8], (L, mlp_dim, hidden_size)).astype(jnp.bfloat16),
        b2=jnp.zeros((L, 1, hidden_size), jnp.float32),
        ls2=jnp.ones((L, 1, hidden_size), jnp.float32),
    )
    return params


if __name__ == "__main__":
    # Small, module-consistent shapes: image 16x16, 4 channels, patch 8 -> 4 patches
    B, C, IMG, PATCH = 2, 4, 16, 8
    HID, LAYERS, HEADS = 32, 2, 2

    key = jax.random.PRNGKey(0)
    kx, kp = jax.random.split(key)
    pixel_values = jax.random.normal(kx, (B, C, IMG, IMG), dtype=jnp.float32)
    params = init_params(kp, IMG, C, PATCH, HID, LAYERS, HEADS)

    # TODO(synk): self.mlp head from __init__ is never used in forward, so it is
    # not materialized here; dropout / drop_path are identity at inference.
    out = vit_plus_plus_forward(pixel_values, params)
    out = jax.block_until_ready(out)

    T = (IMG // PATCH) ** 2 + 1
    assert out['last_hidden_state'].shape == (B, T, HID)
    assert out['pooler_output'].shape == (B, HID)
    assert len(out['hidden_states']) == LAYERS + 1
    print("KERNEL_OK")
</pallas_src>

<mosaic_0001>
module attributes {stable_mosaic.version = 11 : i64} {
  func.func @embed_kernel(%arg0: i32, %arg1: memref<1x4x256xbf16, #tpu.memory_space<vmem>>, %arg2: memref<256x32xbf16, #tpu.memory_space<vmem>>, %arg3: memref<1x32xf32, #tpu.memory_space<vmem>>, %arg4: memref<1x32xf32, #tpu.memory_space<vmem>>, %arg5: memref<5x32xf32, #tpu.memory_space<vmem>>, %arg6: memref<1x5x32xf32, #tpu.memory_space<vmem>>) attributes {dimension_semantics = [#tpu.dimension_semantics<parallel>], iteration_bounds = array<i64: 2>, scalar_prefetch = 0 : i64, scratch_operands = 0 : i64, tpu.core_type = #tpu.core_type<tc>, window_params = [{transform_indices = @transform_0, window_bounds = array<i64: 1, 4, 256>}, {pipeline_mode = #tpu.pipeline_mode<synchronous>, transform_indices = @transform_1, window_bounds = array<i64: 256, 32>}, {pipeline_mode = #tpu.pipeline_mode<synchronous>, transform_indices = @transform_2, window_bounds = array<i64: 1, 32>}, {pipeline_mode = #tpu.pipeline_mode<synchronous>, transform_indices = @transform_3, window_bounds = array<i64: 1, 32>}, {pipeline_mode = #tpu.pipeline_mode<synchronous>, transform_indices = @transform_4, window_bounds = array<i64: 5, 32>}, {transform_indices = @transform_5, window_bounds = array<i64: 1, 5, 32>}]} {
    %c0 = arith.constant 0 : index
    %c0_0 = arith.constant 0 : index
    %c0_1 = arith.constant 0 : index
    %0 = vector.load %arg1[%c0, %c0_0, %c0_1] : memref<1x4x256xbf16, #tpu.memory_space<vmem>>, vector<1x4x256xbf16>
    %1 = vector.shape_cast %0 : vector<1x4x256xbf16> to vector<4x256xbf16>
    %c0_2 = arith.constant 0 : index
    %c0_3 = arith.constant 0 : index
    %2 = vector.load %arg2[%c0_2, %c0_3] : memref<256x32xbf16, #tpu.memory_space<vmem>>, vector<256x32xbf16>
    %cst = arith.constant dense<0.000000e+00> : vector<4x32xf32>
    %3 = tpu.matmul %1, %2, %cst {dimension_numbers = #tpu.dot_dimension_numbers<[1], [0], [0], [1], [0, 0, 1, 1], [], []>} : vector<4x256xbf16>, vector<256x32xbf16>, vector<4x32xf32> -> vector<4x32xf32>
    %c0_4 = arith.constant 0 : index
    %c0_5 = arith.constant 0 : index
    %4 = vector.load %arg3[%c0_4, %c0_5] : memref<1x32xf32, #tpu.memory_space<vmem>>, vector<1x32xf32>
    %5 = vector.broadcast %4 : vector<1x32xf32> to vector<4x32xf32>
    %6 = arith.addf %3, %5 : vector<4x32xf32>
    %c0_6 = arith.constant 0 : index
    %c0_7 = arith.constant 0 : index
    %7 = vector.load %arg4[%c0_6, %c0_7] : memref<1x32xf32, #tpu.memory_space<vmem>>, vector<1x32xf32>
    %c0_8 = arith.constant 0 : index
    %c0_9 = arith.constant 0 : index
    %8 = vector.load %arg5[%c0_8, %c0_9] : memref<5x32xf32, #tpu.memory_space<vmem>>, vector<1x32xf32>
    %9 = arith.addf %7, %8 : vector<1x32xf32>
    %c0_10 = arith.constant 0 : index
    %c0_11 = arith.constant 0 : index
    %c0_12 = arith.constant 0 : index
    %10 = vector.load %arg6[%c0_10, %c0_11, %c0_12] : memref<1x5x32xf32, #tpu.memory_space<vmem>>, vector<1x1x32xf32>
    %11 = vector.shape_cast %10 : vector<1x1x32xf32> to vector<1x32xf32>
    %12 = vector.shape_cast %9 : vector<1x32xf32> to vector<1x1x32xf32>
    tpu.vector_store %arg6[%c0_10, %c0_11, %c0_12], %12 {strides = array<i32>} : memref<1x5x32xf32, #tpu.memory_space<vmem>>, vector<1x1x32xf32>,
    %c1 = arith.constant 1 : index
    %c0_13 = arith.constant 0 : index
    %13 = vector.load %arg5[%c1, %c0_13] : memref<5x32xf32, #tpu.memory_space<vmem>>, vector<4x32xf32>
    %14 = arith.addf %6, %13 : vector<4x32xf32>
    %c0_14 = arith.constant 0 : index
    %c1_15 = arith.constant 1 : index
    %c0_16 = arith.constant 0 : index
    %15 = vector.load %arg6[%c0_14, %c1_15, %c0_16] : memref<1x5x32xf32, #tpu.memory_space<vmem>>, vector<1x4x32xf32>
    %16 = vector.shape_cast %15 : vector<1x4x32xf32> to vector<4x32xf32>
    %17 = vector.shape_cast %14 : vector<4x32xf32> to vector<1x4x32xf32>
    tpu.vector_store %arg6[%c0_14, %c1_15, %c0_16], %17 {strides = array<i32>} : memref<1x5x32xf32, #tpu.memory_space<vmem>>, vector<1x4x32xf32>,
    return
  }
  func.func @transform_0(%arg0: i32) -> (i32, i32, i32) {
    %c0_i32 = arith.constant 0 : i32
    %c0_i32_0 = arith.constant 0 : i32
    %c0_i32_1 = arith.constant 0 : i32
    return %arg0, %c0_i32, %c0_i32_0 : i32, i32, i32
  }
  func.func @transform_1(%arg0: i32) -> (i32, i32) {
    %c0_i32 = arith.constant 0 : i32
    %c0_i32_0 = arith.constant 0 : i32
    %c0_i32_1 = arith.constant 0 : i32
    return %c0_i32, %c0_i32_0 : i32, i32
  }
  func.func @transform_2(%arg0: i32) -> (i32, i32) {
    %c0_i32 = arith.constant 0 : i32
    %c0_i32_0 = arith.constant 0 : i32
    %c0_i32_1 = arith.constant 0 : i32
    return %c0_i32, %c0_i32_0 : i32, i32
  }
  func.func @transform_3(%arg0: i32) -> (i32, i32) {
    %c0_i32 = arith.constant 0 : i32
    %c0_i32_0 = arith.constant 0 : i32
    %c0_i32_1 = arith.constant 0 : i32
    return %c0_i32, %c0_i32_0 : i32, i32
  }
  func.func @transform_4(%arg0: i32) -> (i32, i32) {
    %c0_i32 = arith.constant 0 : i32
    %c0_i32_0 = arith.constant 0 : i32
    %c0_i32_1 = arith.constant 0 : i32
    return %c0_i32, %c0_i32_0 : i32, i32
  }
  func.func @transform_5(%arg0: i32) -> (i32, i32, i32) {
    %c0_i32 = arith.constant 0 : i32
    %c0_i32_0 = arith.constant 0 : i32
    %c0_i32_1 = arith.constant 0 : i32
    return %arg0, %c0_i32, %c0_i32_0 : i32, i32, i32
  }
}

</mosaic_0001>

<llo_original>
// kernel: tpu_custom_call.1
$region0: #{tpu_custom_call.1}
  #allocation0 [shape = 'u32[]', space=smem, size = 0x4, offset = 0x4, fixed_abs, tag = 'smem constant byte address 0x4 - core index']
  #allocation1 [shape = 'u32[144,128]{1,0:T(1,128)}', space=vmem, size = 0x12000, scoped, tag = 'internal scratch']
  %s0 = inlined_call_operand.vmem [shape: bf16[2,4,256], index: 0, kind: input, shape index: {}]
  %s1 = inlined_call_operand.vmem [shape: bf16[256,32], index: 1, kind: input, shape index: {}]
  %s2 = inlined_call_operand.vmem [shape: f32[1,32], index: 2, kind: input, shape index: {}]
  %s3 = inlined_call_operand.vmem [shape: f32[1,32], index: 3, kind: input, shape index: {}]
  %s4 = inlined_call_operand.vmem [shape: f32[5,32], index: 4, kind: input, shape index: {}]
  %s5 = inlined_call_operand.vmem [shape: f32[2,5,32], index: 5, kind: output, shape index: {}]
  %s6 = sld [smem:[#allocation0]]
  $region53: #{tpu_custom_call.1} parent=0
    _
  %s8 = ssub.s32 1, %s6
  %s9 = scalar_select 0, %s8, %s6
  loop: start=0, step=1, limit=4
  $region2: #{tpu_custom_call.1} parent=0 // loop_pre_header
    _
  $region3: #{tpu_custom_call.1} parent=0 // loop_header
    %s11 = sphi 0, %s15
    %p12 = scmp.ge.s32.totalorder %s11, 4
    %s21 = sphi 0, %s23
    %s24 = sphi 0, %s21
    %s25 = sphi 0, %s24
    %s41 = sphi 0, %s25
    %s45 = sphi 0, %s45
    %s47 = sphi 0, %s45
    %s48 = sphi 0, %s47
    %s62 = sphi 0, %s48
    %s66 = sphi 0, %s66
    %s68 = sphi 0, %s66
    %s69 = sphi 0, %s68
    %s83 = sphi 0, %s69
    %s87 = sphi 0, %s87
    %s89 = sphi 0, %s87
    %s90 = sphi 0, %s89
    %s104 = sphi 0, %s90
    %s108 = sphi 0, %s108
    %s110 = sphi 0, %s108
    %s111 = sphi 0, %s110
    %s125 = sphi 0, %s111
    %s131 = sphi 0, %s133
    %s134 = sphi 0, %s131
    %s135 = sphi 0, %s134
    %s151 = sphi 0, %s135
  $region4: #{tpu_custom_call.1} parent=0 // loop_header_branch
    %14 = sbr.rel (%p12) target = $region8
  $region5: #{tpu_custom_call.1} parent=0 // loop_body
    %s16 = ssub.s32 %s11, 1
    %s17 = ssub.s32 %s11, 2
    %s18 = sadd.s32 %s11, 1
    %s19 = ssub.s32 %s11, %s18
    %p20 = scmp.eq.s32.totalorder %s19, 0
    %s22 = sadd.s32 %s21, 1
    %s23 = scalar_select %p20, %s21, %s22
    %p26 = pneg %p20
    %p27 = scmp.eq.s32.totalorder %s11, 1
    %p28 = por %p26, %p27
    %p29 = scmp.ne.s32.totalorder %s21, %s24
    %p30 = scmp.eq.s32.totalorder %s11, 0
    %p31 = por %p29, %p30
    %p32 = scmp.ne.s32.totalorder %s21, %s24
    %p33 = scmp.eq.s32.totalorder %s16, 1
    %p34 = por %p32, %p33
    %p35 = scmp.ne.s32.totalorder %s24, %s25
    %p36 = scmp.eq.s32.totalorder %s16, 0
    %p37 = por %p35, %p36
    %p38 = scmp.ne.s32.totalorder %s24, %s25
    %p39 = scmp.eq.s32.totalorder %s17, 1
    %p40 = por %p38, %p39
    %p42 = scmp.ne.s32.totalorder %s25, %s41
    %p43 = scmp.eq.s32.totalorder %s17, 0
    %p44 = por %p42, %p43
    %s46 = sadd.s32 %s45, 1
    %p49 = scmp.eq.s32.totalorder %s11, 1
    %p50 = scmp.ne.s32.totalorder %s45, %s47
    %p51 = scmp.eq.s32.totalorder %s11, 0
    %p52 = por %p50, %p51
    %p53 = scmp.ne.s32.totalorder %s45, %s47
    %p54 = scmp.eq.s32.totalorder %s16, 1
    %p55 = por %p53, %p54
    %p56 = scmp.ne.s32.totalorder %s47, %s48
    %p57 = scmp.eq.s32.totalorder %s16, 0
    %p58 = por %p56, %p57
    %p59 = scmp.ne.s32.totalorder %s47, %s48
    %p60 = scmp.eq.s32.totalorder %s17, 1
    %p61 = por %p59, %p60
    %p63 = scmp.ne.s32.totalorder %s48, %s62
    %p64 = scmp.eq.s32.totalorder %s17, 0
    %p65 = por %p63, %p64
    %s67 = sadd.s32 %s66, 1
    %p70 = scmp.eq.s32.totalorder %s11, 1
    %p71 = scmp.ne.s32.totalorder %s66, %s68
    %p72 = scmp.eq.s32.totalorder %s11, 0
    %p73 = por %p71, %p72
    %p74 = scmp.ne.s32.totalorder %s66, %s68
    %p75 = scmp.eq.s32.totalorder %s16, 1
    %p76 = por %p74, %p75
    %p77 = scmp.ne.s32.totalorder %s68, %s69
    %p78 = scmp.eq.s32.totalorder %s16, 0
    %p79 = por %p77, %p78
    %p80 = scmp.ne.s32.totalorder %s68, %s69
    %p81 = scmp.eq.s32.totalorder %s17, 1
    %p82 = por %p80, %p81
    %p84 = scmp.ne.s32.totalorder %s69, %s83
    %p85 = scmp.eq.s32.totalorder %s17, 0
    %p86 = por %p84, %p85
    %s88 = sadd.s32 %s87, 1
    %p91 = scmp.eq.s32.totalorder %s11, 1
    %p92 = scmp.ne.s32.totalorder %s87, %s89
    %p93 = scmp.eq.s32.totalorder %s11, 0
    %p94 = por %p92, %p93
    %p95 = scmp.ne.s32.totalorder %s87, %s89
    %p96 = scmp.eq.s32.totalorder %s16, 1
    %p97 = por %p95, %p96
    %p98 = scmp.ne.s32.totalorder %s89, %s90
    %p99 = scmp.eq.s32.totalorder %s16, 0
    %p100 = por %p98, %p99
    %p101 = scmp.ne.s32.totalorder %s89, %s90
    %p102 = scmp.eq.s32.totalorder %s17, 1
    %p103 = por %p101, %p102
    %p105 = scmp.ne.s32.totalorder %s90, %s104
    %p106 = scmp.eq.s32.totalorder %s17, 0
    %p107 = por %p105, %p106
    %s109 = sadd.s32 %s108, 1
    %p112 = scmp.eq.s32.totalorder %s11, 1
    %p113 = scmp.ne.s32.totalorder %s108, %s110
    %p114 = scmp.eq.s32.totalorder %s11, 0
    %p115 = por %p113, %p114
    %p116 = scmp.ne.s32.totalorder %s108, %s110
    %p117 = scmp.eq.s32.totalorder %s16, 1
    %p118 = por %p116, %p117
    %p119 = scmp.ne.s32.totalorder %s110, %s111
    %p120 = scmp.eq.s32.totalorder %s16, 0
    %p121 = por %p119, %p120
    %p122 = scmp.ne.s32.totalorder %s110, %s111
    %p123 = scmp.eq.s32.totalorder %s17, 1
    %p124 = por %p122, %p123
    %p126 = scmp.ne.s32.totalorder %s111, %s125
    %p127 = scmp.eq.s32.totalorder %s17, 0
    %p128 = por %p126, %p127
    %s129 = ssub.s32 %s11, %s18
    %p130 = scmp.eq.s32.totalorder %s129, 0
    %s132 = sadd.s32 %s131, 1
    %s133 = scalar_select %p130, %s131, %s132
    %p136 = pneg %p130
    %p137 = scmp.eq.s32.totalorder %s11, 1
    %p138 = por %p136, %p137
    %p139 = scmp.ne.s32.totalorder %s131, %s134
    %p140 = scmp.eq.s32.totalorder %s11, 0
    %p141 = por %p139, %p140
    %p142 = scmp.ne.s32.totalorder %s131, %s134
    %p143 = scmp.eq.s32.totalorder %s16, 1
    %p144 = por %p142, %p143
    %p145 = scmp.ne.s32.totalorder %s134, %s135
    %p146 = scmp.eq.s32.totalorder %s16, 0
    %p147 = por %p145, %p146
    %p148 = scmp.ne.s32.totalorder %s134, %s135
    %p149 = scmp.eq.s32.totalorder %s17, 1
    %p150 = por %p148, %p149
    %p152 = scmp.ne.s32.totalorder %s135, %s151
    %p153 = scmp.eq.s32.totalorder %s17, 0
    %p154 = por %p152, %p153
    %p155 = scmp.le.s32.totalorder 1, %s11
    %p156 = scmp.lt.s32.totalorder %s11, 3
    %p157 = pnand %p155, %p156
    %p158 = pneg %p157
    // Predicated region
    $region9: #{tpu_custom_call.1} parent=5 // pred_check
      _
    $region10: #{tpu_custom_call.1} parent=5 // pred_check_branch
      %160 = sbr.rel (%p157) target = $region12
    $region11: #{tpu_custom_call.1} parent=5 // pred_region
      %s161 = ssub.s32 %s11, 1
      // Predicated region
      $region13: #{tpu_custom_call.1} parent=11 // pred_check
        %p162 = pneg %p58
      $region14: #{tpu_custom_call.1} parent=11 // pred_check_branch
        %164 = sbr.rel (%p162) target = $region16
      $region15: #{tpu_custom_call.1} parent=11 // pred_region
        _
      $region16: #{tpu_custom_call.1} parent=11 // pred_fallthru
        _
      // Predicated region
      $region17: #{tpu_custom_call.1} parent=11 // pred_check
        %p165 = pneg %p79
      $region18: #{tpu_custom_call.1} parent=11 // pred_check_branch
        %167 = sbr.rel (%p165) target = $region20
      $region19: #{tpu_custom_call.1} parent=11 // pred_region
        _
      $region20: #{tpu_custom_call.1} parent=11 // pred_fallthru
        _
      // Predicated region
      $region21: #{tpu_custom_call.1} parent=11 // pred_check
        %p168 = pneg %p100
      $region22: #{tpu_custom_call.1} parent=11 // pred_check_branch
        %170 = sbr.rel (%p168) target = $region24
      $region23: #{tpu_custom_call.1} parent=11 // pred_region
        _
      $region24: #{tpu_custom_call.1} parent=11 // pred_fallthru
        _
      // Predicated region
      $region25: #{tpu_custom_call.1} parent=11 // pred_check
        %p171 = pneg %p121
      $region26: #{tpu_custom_call.1} parent=11 // pred_check_branch
        %173 = sbr.rel (%p171) target = $region28
      $region27: #{tpu_custom_call.1} parent=11 // pred_region
        _
      $region28: #{tpu_custom_call.1} parent=11 // pred_fallthru
        _
    $region12: #{tpu_custom_call.1} parent=5 // pred_fallthru
      _
    %p174 = scmp.lt.s32.totalorder %s11, 2
    // Predicated region
    $region29: #{tpu_custom_call.1} parent=5 // pred_check
      %p175 = pneg %p174
    $region30: #{tpu_custom_call.1} parent=5 // pred_check_branch
      %177 = sbr.rel (%p175) target = $region32
    $region31: #{tpu_custom_call.1} parent=5 // pred_region
      // Predicated region
      $region33: #{tpu_custom_call.1} parent=31 // pred_check
        %p178 = pneg %p31
      $region34: #{tpu_custom_call.1} parent=31 // pred_check_branch
        %180 = sbr.rel (%p178) target = $region36
      $region35: #{tpu_custom_call.1} parent=31 // pred_region
        %p181 = scmp.lt.s32.totalorder %s11, 1
        %s182 = scalar_select %p181, %s11, 1
        %s183 = smul.addr %s182, 2
        %s184 = smul.addr %s183, 2
        %s185 = scalar_lea.vmem %s0, %s184
      $region36: #{tpu_custom_call.1} parent=31 // pred_fallthru
        _
    $region32: #{tpu_custom_call.1} parent=5 // pred_fallthru
      _
    %p186 = scmp.le.s32.totalorder 1, %s11
    %p187 = scmp.lt.s32.totalorder %s11, 3
    %p188 = pnand %p186, %p187
    %p189 = pneg %p188
    // Predicated region
    $region37: #{tpu_custom_call.1} parent=5 // pred_check
      _
    $region38: #{tpu_custom_call.1} parent=5 // pred_check_branch
      %191 = sbr.rel (%p188) target = $region40
    $region39: #{tpu_custom_call.1} parent=5 // pred_region
      %s192 = ssub.s32 %s11, 1
      %p193 = scmp.lt.s32.totalorder %s16, 1
      %s194 = scalar_select %p193, %s16, 1
      %s195 = smul.addr %s194, 2
      %s196 = smul.addr %s195, 2
      %s197 = scalar_lea.vmem %s0, %s196
      %p198 = pneg %p37
      %p199 = pneg %p34
      %p200 = pneg %p58
      %p201 = pneg %p55
      %p202 = pneg %p79
      %p203 = pneg %p76
      %p204 = pneg %p100
      %p205 = pneg %p97
      %p206 = pneg %p121
      %p207 = pneg %p118
      %p208 = pneg %p147
      %p209 = pneg %p144
      %p210 = scmp.lt.s32.totalorder %s16, 1
      %s211 = scalar_select %p210, %s16, 1
      %s212 = smul.addr %s211, 8
      %s213 = scalar_lea.vmem %s5, %s212
      %p214 = scmp.lt.s32.totalorder %s16, 1
      %s215 = scalar_select %p214, %s16, 1
      %s216 = smul.addr %s215, 2
      %s217 = smul.addr %s216, 2
      %s218 = scalar_lea.vmem %s0, %s217
      %p219 = scmp.lt.s32.totalorder %s16, 1
      %s220 = scalar_select %p219, %s16, 1
      %s221 = smul.addr %s220, 8
      %s222 = scalar_lea.vmem %s5, %s221
      %v224 = vld [vmem:[%s218] sm:$0xf]
      %v225 = vld [vmem:[%s1] sm:$0xf]
      %v226 = vld [vmem:[%s1 + $0x4] sm:$0xf]
      %v227 = vld [vmem:[%s1 + $0x8] sm:$0xf]
      %v228 = vld [vmem:[%s1 + $0xc] sm:$0xf]
      %v229 = vld [vmem:[%s1 + $0x10] sm:$0xf]
      %v230 = vld [vmem:[%s1 + $0x14] sm:$0xf]
      %v231 = vld [vmem:[%s1 + $0x18] sm:$0xf]
      %v232 = vld [vmem:[%s1 + $0x1c] sm:$0xf]
      %v233 = vld [vmem:[%s1 + $0x20] sm:$0xf]
      %v234 = vld [vmem:[%s1 + $0x24] sm:$0xf]
      %v235 = vld [vmem:[%s1 + $0x28] sm:$0xf]
      %v236 = vld [vmem:[%s1 + $0x2c] sm:$0xf]
      %v237 = vld [vmem:[%s1 + $0x30] sm:$0xf]
      %v238 = vld [vmem:[%s1 + $0x34] sm:$0xf]
      %v239 = vld [vmem:[%s1 + $0x38] sm:$0xf]
      %v240 = vld [vmem:[%s1 + $0x3c] sm:$0xf]
      %v241 = vld [vmem:[%s1 + $0x40] sm:$0xf]
      %v242 = vld [vmem:[%s1 + $0x44] sm:$0xf]
      %v243 = vld [vmem:[%s1 + $0x48] sm:$0xf]
      %v244 = vld [vmem:[%s1 + $0x4c] sm:$0xf]
      %v245 = vld [vmem:[%s1 + $0x50] sm:$0xf]
      %v246 = vld [vmem:[%s1 + $0x54] sm:$0xf]
      %v247 = vld [vmem:[%s1 + $0x58] sm:$0xf]
      %v248 = vld [vmem:[%s1 + $0x5c] sm:$0xf]
      %v249 = vld [vmem:[%s1 + $0x60] sm:$0xf]
      %v250 = vld [vmem:[%s1 + $0x64] sm:$0xf]
      %v251 = vld [vmem:[%s1 + $0x68] sm:$0xf]
      %v252 = vld [vmem:[%s1 + $0x6c] sm:$0xf]
      %v253 = vld [vmem:[%s1 + $0x70] sm:$0xf]
      %v254 = vld [vmem:[%s1 + $0x74] sm:$0xf]
      %v255 = vld [vmem:[%s1 + $0x78] sm:$0xf]
      %v256 = vld [vmem:[%s1 + $0x7c] sm:$0xf]
      %v257 = vld [vmem:[%s2] sm:$0x1]
      %v259 = vlaneseq
      %v260 = vshrl.u32 %v259, 7
      %v261 = vsub.s32 0, %v260
      %v262 = vrot.slane %v257, %v261
      %v266 = vunpack.c.l.s4 1983009808
      %v267 = vunpack.c.0.s8 %v266
      %v268 = vlaneseq
      %v269 = vshrl.u32 %v268, 7
      %v270 = vsub.s32 %v267, %v269
      %v271 = vrot.slane %v224, %v270
      %v272 = vcombine.high %v271, %v271
      %v307 = vunpack.c.l.b16 %v225
      %v308 = vunpack.c.l.b16 %v226
      %v309 = vunpack.c.l.b16 %v227
      %v310 = vunpack.c.l.b16 %v228
      %v311 = vunpack.c.l.b16 %v229
      %v312 = vunpack.c.l.b16 %v230
      %v313 = vunpack.c.l.b16 %v231
      %v314 = vunpack.c.l.b16 %v232
      %v315 = vunpack.c.l.b16 %v233
      %v316 = vunpack.c.l.b16 %v234
      %v317 = vunpack.c.l.b16 %v235
      %v318 = vunpack.c.l.b16 %v236
      %v319 = vunpack.c.l.b16 %v237
      %v320 = vunpack.c.l.b16 %v238
      %v321 = vunpack.c.l.b16 %v239
      %v322 = vunpack.c.l.b16 %v240
      %v323 = vunpack.c.l.b16 %v241
      %v324 = vunpack.c.l.b16 %v242
      %v325 = vunpack.c.l.b16 %v243
      %v326 = vunpack.c.l.b16 %v244
      %v327 = vunpack.c.l.b16 %v245
      %v328 = vunpack.c.l.b16 %v246
      %v329 = vunpack.c.l.b16 %v247
      %v330 = vunpack.c.l.b16 %v248
      %v331 = vunpack.c.l.b16 %v249
      %v332 = vunpack.c.l.b16 %v250
      %v333 = vunpack.c.l.b16 %v251
      %v334 = vunpack.c.l.b16 %v252
      %v335 = vunpack.c.l.b16 %v253
      %v336 = vunpack.c.l.b16 %v254
      %v337 = vunpack.c.l.b16 %v255
      %v338 = vunpack.c.l.b16 %v256
      %v339 = vpack.c.b16 %v308, %v307
      %v340 = vpack.c.b16 %v310, %v309
      %v341 = vpack.c.b16 %v312, %v311
      %v342 = vpack.c.b16 %v314, %v313
      %v343 = vpack.c.b16 %v316, %v315
      %v344 = vpack.c.b16 %v318, %v317
      %v345 = vpack.c.b16 %v320, %v319
      %v346 = vpack.c.b16 %v322, %v321
      %v347 = vpack.c.b16 %v324, %v323
      %v348 = vpack.c.b16 %v326, %v325
      %v349 = vpack.c.b16 %v328, %v327
      %v350 = vpack.c.b16 %v330, %v329
      %v351 = vpack.c.b16 %v332, %v331
      %v352 = vpack.c.b16 %v334, %v333
      %v353 = vpack.c.b16 %v336, %v335
      %v354 = vpack.c.b16 %v338, %v337
      %371 = vmatprep.subr.bf16.mxu0 0
      %372 = vmatpush1.bf16.msra.mxu0 %v346
      %373 = vmatprep.subr.bf16.mxu0 0
      %374 = vmatpush1.bf16.msra.mxu0 %v345
      %375 = vmatprep.subr.bf16.mxu0 0
      %376 = vmatpush1.bf16.msra.mxu0 %v344
      %377 = vmatprep.subr.bf16.mxu0 0
      %378 = vmatpush1.bf16.msra.mxu0 %v343
      %379 = vmatprep.subr.bf16.mxu0 0
      %380 = vmatpush1.bf16.msra.mxu0 %v342
      %381 = vmatprep.subr.bf16.mxu0 0
      %382 = vmatpush1.bf16.msra.mxu0 %v341
      %383 = vmatprep.subr.bf16.mxu0 0
      %384 = vmatpush1.bf16.msra.mxu0 %v340
      %385 = vmatprep.subr.bf16.mxu0 0
      %386 = vmatpush1.bf16.msra.mxu0 %v339
      %387 = vmatprep.subr.bf16.mxu0 0
      %388 = vmatpush2.bf16.msra.mxu0 %v354
      %389 = vmatprep.subr.bf16.mxu0 0
      %390 = vmatpush2.bf16.msra.mxu0 %v353
      %391 = vmatprep.subr.bf16.mxu0 0
      %392 = vmatpush2.bf16.msra.mxu0 %v352
      %393 = vmatprep.subr.bf16.mxu0 0
      %394 = vmatpush2.bf16.msra.mxu0 %v351
      %395 = vmatprep.subr.bf16.mxu0 0
      %396 = vmatpush2.bf16.msra.mxu0 %v350
      %397 = vmatprep.subr.bf16.mxu0 0
      %398 = vmatpush2.bf16.msra.mxu0 %v349
      %399 = vmatprep.subr.bf16.mxu0 0
      %400 = vmatpush2.bf16.msra.mxu0 %v348
      %401 = vmatprep.subr.bf16.mxu0 0
      %402 = vmatpush2.bf16.msra.mxu0 %v347
      %403 = vmatprep.mubr.bf16.mxu0 %v272
      %404 = vmatmul.mubr.bf16.gmra.mxu0 %v271
      %v405 = vpop.f32.mrf.mxu0
      %v406 = vadd.f32 %v262, %v405
      %v407 = vpop.f32.mrf.mxu0
      %v408 = vpop.f32.mrf.mxu0
      %v409 = vpop.f32.mrf.mxu0
      %410 = vdwg.mxu0
      %v411 = vld [vmem:[%s3] sm:$0x1]
      %v412 = vld [vmem:[%s4] sm:$0x1]
      %v413 = vadd.f32 %v411, %v412
      %vm414 = vcmask 253952
      %415 = vst.msk [vmem:[%s222] sm:$0x1] %vm414, %v413
      %v416 = vld [vmem:[%s4 + $0x1] sm:$0xf]
      %v417 = vadd.f32 %v406, %v416
      %vm418 = vcmask 257024
      %419 = vst.msk [vmem:[%s222 + $0x1] sm:$0xf] %vm418, %v417
      %p420 = scmp.lt.s32.totalorder %s16, 1
      %s421 = scalar_select %p420, %s16, 1
      %s422 = smul.addr %s421, 8
      %s423 = scalar_lea.vmem %s5, %s422
      // Predicated region
      $region41: #{tpu_custom_call.1} parent=39 // pred_check
        %p424 = pneg %p144
      $region42: #{tpu_custom_call.1} parent=39 // pred_check_branch
        %426 = sbr.rel (%p424) target = $region44
      $region43: #{tpu_custom_call.1} parent=39 // pred_region
        _
      $region44: #{tpu_custom_call.1} parent=39 // pred_fallthru
        _
    $region40: #{tpu_custom_call.1} parent=5 // pred_fallthru
      _
    %p427 = scmp.le.s32.totalorder 2, %s11
    // Predicated region
    $region45: #{tpu_custom_call.1} parent=5 // pred_check
      %p428 = pneg %p427
    $region46: #{tpu_custom_call.1} parent=5 // pred_check_branch
      %430 = sbr.rel (%p428) target = $region48
    $region47: #{tpu_custom_call.1} parent=5 // pred_region
      %s431 = ssub.s32 %s11, 2
      // Predicated region
      $region49: #{tpu_custom_call.1} parent=47 // pred_check
        %p432 = pneg %p150
      $region50: #{tpu_custom_call.1} parent=47 // pred_check_branch
        %434 = sbr.rel (%p432) target = $region52
      $region51: #{tpu_custom_call.1} parent=47 // pred_region
        %p435 = scmp.lt.s32.totalorder %s17, 1
        %s436 = scalar_select %p435, %s17, 1
        %s437 = smul.addr %s436, 8
        %s438 = scalar_lea.vmem %s5, %s437
      $region52: #{tpu_custom_call.1} parent=47 // pred_fallthru
        _
    $region48: #{tpu_custom_call.1} parent=5 // pred_fallthru
      _
  $region6: #{tpu_custom_call.1} parent=0 // loop_footer
    %s15 = sadd.s32 1, %s11
  $region7: #{tpu_custom_call.1} parent=0 // loop_footer_branch
    %10 = sbr.rel target = $region3
  $region8: #{tpu_custom_call.1} parent=0 // loop_exit
    _

</llo_original>
